<compile_context>
chip_gen: v5e
topology: v5e:2x2
jax: 0.10.0
libtpu: 0.0.40
codegen_flags: <defaults>
</compile_context>

<pallas_src>
import functools

import jax
import jax.numpy as jnp
from jax.experimental import pallas as pl
from jax.experimental.pallas import tpu as pltpu

_MXU_REDUCE_MAX_HW = 512  # small-spatial GAP: reduce on the MXU, not the XLU


def _gap_sum_kernel(x_ref, o_ref, *, inv_hw):
    # Large H*W: lane-dense reduce over the flattened spatial axis, f32
    # accumulation during the reduce.  HBM-bandwidth bound in this regime.
    s = jnp.sum(x_ref[...], axis=-1, keepdims=True, dtype=jnp.float32)
    o_ref[...] = (s * inv_hw).astype(o_ref.dtype)


def _gap_mxu_kernel(x_ref, o_ref, *, inv_hw):
    # Small H*W: (rows_blk, hw) @ (hw, 1) on the MXU with f32 accumulation.
    # Keeps the per-8-row cross-lane reduce tree off the XLU (the binding unit
    # for 7x7/14x14 GAP on v6e/v7x); the MXU slot is otherwise idle here.
    ones = jnp.ones((x_ref.shape[-1], 1), dtype=x_ref.dtype)
    s = jnp.dot(x_ref[...], ones, preferred_element_type=jnp.float32)
    o_ref[...] = (s * inv_hw).astype(o_ref.dtype)


def _round_up(v, m):
    return ((v + m - 1) // m) * m


def global_avg_pool2d(x):
    """Equivalent of torch.mean(x, dim=(2, 3)) for NCHW input."""
    N, C, H, W = x.shape
    rows = N * C
    hw = H * W

    # Contiguous row-major reshape: no transpose, no data movement.
    x2d = x.reshape(rows, hw)

    itemsize = jnp.dtype(x.dtype).itemsize
    # Native sublane packing: f32 -> 8, bf16 -> 16, int8/fp8 -> 32.
    sub = {4: 8, 2: 16, 1: 32}.get(itemsize, 8)
    # Lane padding: a (r, hw) tile physically occupies ceil(hw/128)*128 lanes.
    padded_hw = _round_up(hw, 128)
    bytes_per_row = padded_hw * itemsize

    # Generation-aware VMEM budget (v7x: 64 MiB/TC, v5e/v6e: 128 MiB).
    try:
        vmem_cap = int(pltpu.get_tpu_info().vmem_capacity_bytes)
    except Exception:  # pragma: no cover - conservative fallback (v7x per-TC)
        vmem_cap = 64 * 1024 * 1024
    vmem_budget = int(0.72 * vmem_cap)

    # Block target: large enough to amortize the ~0.35 us per-grid-step
    # overhead, small enough that 2x double-buffered inputs (+ output) fit.
    target_block_bytes = (16 << 20) if vmem_cap > (80 << 20) else (10 << 20)
    target_block_bytes = min(target_block_bytes, vmem_budget // 3)

    if rows <= sub:
        rows_blk = rows  # single block equal to the full dim (allowed shape)
    else:
        rows_blk = max(sub, target_block_bytes // max(bytes_per_row, 1))
        rows_blk = max(sub, (rows_blk // sub) * sub)        # sublane multiple
        rows_blk = min(rows_blk, max(sub, (rows // sub) * sub))
        # Guarantee >=2 grid steps when possible so the "parallel" axis can be
        # sharded across both v7x TensorCores (no effect on v5e/v6e, 1 TC).
        if pl.cdiv(rows, rows_blk) < 2:
            half = _round_up(pl.cdiv(rows, 2), sub)
            if half < rows:
                rows_blk = half

    grid = (pl.cdiv(rows, rows_blk),)

    # 2x double-buffered input blocks + tiny output + slack, capped at budget.
    block_bytes = rows_blk * bytes_per_row
    vmem_limit = int(min(vmem_budget,
                         max(3 * block_bytes + (2 << 20), 16 << 20)))

    use_mxu = (hw <= _MXU_REDUCE_MAX_HW
               and jnp.issubdtype(x.dtype, jnp.floating))
    kernel = _gap_mxu_kernel if use_mxu else _gap_sum_kernel

    out2d = pl.pallas_call(
        functools.partial(kernel, inv_hw=1.0 / float(hw)),
        out_shape=jax.ShapeDtypeStruct((rows, 1), x.dtype),
        grid=grid,
        in_specs=[pl.BlockSpec((rows_blk, hw), lambda i: (i, 0))],
        out_specs=pl.BlockSpec((rows_blk, 1), lambda i: (i, 0)),
        compiler_params=pltpu.CompilerParams(
            dimension_semantics=("parallel",),
            vmem_limit_bytes=vmem_limit,
        ),
    )(x2d)

    return out2d.reshape(N, C)


if __name__ == "__main__":
    key = jax.random.PRNGKey(0)

    # Primary check: small NCHW input consistent with the module's forward.
    x = jax.random.normal(key, (2, 4, 16, 16), dtype=jnp.float32)
    out = jax.block_until_ready(global_avg_pool2d(x))
    ref = jnp.mean(x, axis=(2, 3))
    assert out.shape == (2, 4), out.shape
    assert jnp.allclose(out, ref, atol=1e-5, rtol=1e-5), "mismatch (MXU path)"

    # Multi-grid-step (megacore-splittable) MXU path.
    x2 = jax.random.normal(key, (2, 64, 16, 16), dtype=jnp.float32)
    out2 = jax.block_until_ready(global_avg_pool2d(x2))
    ref2 = jnp.mean(x2, axis=(2, 3))
    assert jnp.allclose(out2, ref2, atol=1e-5, rtol=1e-5), "mismatch (multi-step)"

    # Large-H*W lane-dense jnp.sum path (hw not a multiple of 128).
    x3 = jax.random.normal(key, (2, 4, 40, 40), dtype=jnp.float32)
    out3 = jax.block_until_ready(global_avg_pool2d(x3))
    ref3 = jnp.mean(x3, axis=(2, 3))
    assert jnp.allclose(out3, ref3, atol=1e-5, rtol=1e-5), "mismatch (sum path)"

    print("KERNEL_OK")
</pallas_src>

<mosaic_0001>
module attributes {stable_mosaic.version = 11 : i64} {
  func.func @_gap_mxu_kernel(%arg0: i32, %arg1: memref<8x256xf32, #tpu.memory_space<vmem>>, %arg2: memref<8x1xf32, #tpu.memory_space<vmem>>) attributes {dimension_semantics = [#tpu.dimension_semantics<parallel>], iteration_bounds = array<i64: 1>, scalar_prefetch = 0 : i64, scratch_operands = 0 : i64, tpu.core_type = #tpu.core_type<tc>, window_params = [{transform_indices = @transform_0, window_bounds = array<i64: 8, 256>}, {transform_indices = @transform_1, window_bounds = array<i64: 8, 1>}]} {
    %cst = arith.constant 1.000000e+00 : f32
    %0 = vector.broadcast %cst : f32 to vector<256x1xf32>
    %c0 = arith.constant 0 : index
    %c0_0 = arith.constant 0 : index
    %1 = vector.load %arg1[%c0, %c0_0] : memref<8x256xf32, #tpu.memory_space<vmem>>, vector<8x256xf32>
    %cst_1 = arith.constant dense<0.000000e+00> : vector<8x1xf32>
    %2 = tpu.matmul %1, %0, %cst_1 {dimension_numbers = #tpu.dot_dimension_numbers<[1], [0], [0], [1], [0, 0, 1, 1], [], []>} : vector<8x256xf32>, vector<256x1xf32>, vector<8x1xf32> -> vector<8x1xf32>
    %cst_2 = arith.constant 3.906250e-03 : f32
    %3 = vector.broadcast %cst_2 : f32 to vector<8x1xf32>
    %4 = arith.mulf %2, %3 : vector<8x1xf32>
    %c0_3 = arith.constant 0 : index
    %c0_4 = arith.constant 0 : index
    %5 = vector.load %arg2[%c0_3, %c0_4] : memref<8x1xf32, #tpu.memory_space<vmem>>, vector<8x1xf32>
    tpu.vector_store %arg2[%c0_3, %c0_4], %4 {strides = array<i32>} : memref<8x1xf32, #tpu.memory_space<vmem>>, vector<8x1xf32>,
    return
  }
  func.func @transform_0(%arg0: i32) -> (i32, i32) {
    %c0_i32 = arith.constant 0 : i32
    %c0_i32_0 = arith.constant 0 : i32
    return %arg0, %c0_i32 : i32, i32
  }
  func.func @transform_1(%arg0: i32) -> (i32, i32) {
    %c0_i32 = arith.constant 0 : i32
    %c0_i32_0 = arith.constant 0 : i32
    return %arg0, %c0_i32 : i32, i32
  }
}

</mosaic_0001>

<llo_original>
// kernel: tpu_custom_call.1
$region0: #{tpu_custom_call.1}
  #allocation0 [shape = 'u32[]', space=smem, size = 0x4, offset = 0x4, fixed_abs, tag = 'smem constant byte address 0x4 - core index']
  #allocation1 [shape = 'u32[72,128]{1,0:T(1,128)}', space=vmem, size = 0x9000, scoped, tag = 'internal scratch']
  %s0 = inlined_call_operand.hbm [shape: f32[8,256], index: 0, kind: input, shape index: {}]
  %s1 = inlined_call_operand.vmem [shape: f32[8,1], index: 1, kind: output, shape index: {}]
  %s2 = sld [smem:[#allocation0]]
  $region18: #{tpu_custom_call.1} parent=0
    _
  %s4 = ssub.s32 1, %s2
  %s5 = scalar_select 0, %s4, %s2
  $region1: #{tpu_custom_call.1} parent=0
    #allocation2 [shape = 'u8[8192]{0}', space=vmem, size = 0x2000, scoped, tag = 'input window, operand 0, single buffered']
    #allocation3 [shape = 's32[1]{0}', space=sflag, size = 0x4, scoped, tag = 'scoped memory for tpu_custom_call.1']
    %6 = vsyncpa [#allocation3], 0
    // Predicated region
    $region2: #{tpu_custom_call.1} parent=1 // pred_check
      _
    $region3: #{tpu_custom_call.1} parent=1 // pred_check_branch
      %8 = sbr.rel (0) target = $region5
    $region4: #{tpu_custom_call.1} parent=1 // pred_region
      %10 = vsyncadd [#allocation3], 0
      %s12 = sshll.u32 %s0, 4
      %s13 = int_to_ptr.hbm [resolvable:$true] %s12
      %s14 = sshll.u32 [#allocation2], 4
      %s15 = int_to_ptr.vmem [resolvable:$true] %s14
      %17 = dma.hbm_to_vmem [thread:$0]  %s13, 256, %s15, [#allocation3]
    $region5: #{tpu_custom_call.1} parent=1 // pred_fallthru
      _
    // Predicated region
    $region6: #{tpu_custom_call.1} parent=1 // pred_check
      _
    $region7: #{tpu_custom_call.1} parent=1 // pred_check_branch
      %19 = sbr.rel (0) target = $region9
    $region8: #{tpu_custom_call.1} parent=1 // pred_region
      %21 = dma.done [#allocation3], 256
    $region9: #{tpu_custom_call.1} parent=1 // pred_fallthru
      _
    %v22 = vld [vmem:[#allocation2] sm:$0xff]
    %v23 = vld [vmem:[#allocation2 + $0x8] sm:$0xff]
    %24 = vmatpush.msra.mxu0 1.0
    %25 = vmatpush.msra.mxu0 1.0
    %26 = vmatpush.msra.mxu0 1.0
    %27 = vmatpush.msra.mxu0 1.0
    %28 = vmatpush.msra.mxu0 1.0
    %29 = vmatpush.msra.mxu0 1.0
    %30 = vmatpush.msra.mxu0 1.0
    %31 = vmatpush.msra.mxu0 1.0
    %32 = vmatpush.msra.mxu0 1.0
    %33 = vmatpush.msra.mxu0 1.0
    %34 = vmatpush.msra.mxu0 1.0
    %35 = vmatpush.msra.mxu0 1.0
    %36 = vmatpush.msra.mxu0 1.0
    %37 = vmatpush.msra.mxu0 1.0
    %38 = vmatpush.msra.mxu0 1.0
    %39 = vmatpush.msra.mxu0 1.0
    %40 = vmatmul.f32.gmra.mxu0 %v22
    %v41 = vpop.f32.mrf.mxu0
    %v42 = vadd.f32 0.0, %v41
    %43 = vdwg.mxu0
    %44 = vmatpush.msra.mxu0 1.0
    %45 = vmatpush.msra.mxu0 1.0
    %46 = vmatpush.msra.mxu0 1.0
    %47 = vmatpush.msra.mxu0 1.0
    %48 = vmatpush.msra.mxu0 1.0
    %49 = vmatpush.msra.mxu0 1.0
    %50 = vmatpush.msra.mxu0 1.0
    %51 = vmatpush.msra.mxu0 1.0
    %52 = vmatpush.msra.mxu0 1.0
    %53 = vmatpush.msra.mxu0 1.0
    %54 = vmatpush.msra.mxu0 1.0
    %55 = vmatpush.msra.mxu0 1.0
    %56 = vmatpush.msra.mxu0 1.0
    %57 = vmatpush.msra.mxu0 1.0
    %58 = vmatpush.msra.mxu0 1.0
    %59 = vmatpush.msra.mxu0 1.0
    %60 = vmatmul.f32.gmra.mxu0 %v23
    %v61 = vpop.f32.mrf.mxu0
    %v62 = vadd.f32 %v42, %v61
    %63 = vdwg.mxu0
    %v64 = vmul.f32 %v62, 0.00390625
    %vm65 = vcmask 7168
    %66 = vst.msk [vmem:[%s1] sm:$0xff] %vm65, %v64
    // Predicated region
    $region10: #{tpu_custom_call.1} parent=1 // pred_check
      _
    $region11: #{tpu_custom_call.1} parent=1 // pred_check_branch
      %68 = sbr.rel (0) target = $region13
    $region12: #{tpu_custom_call.1} parent=1 // pred_region
      _
    $region13: #{tpu_custom_call.1} parent=1 // pred_fallthru
      _
    // Predicated region
    $region14: #{tpu_custom_call.1} parent=1 // pred_check
      _
    $region15: #{tpu_custom_call.1} parent=1 // pred_check_branch
      %70 = sbr.rel (0) target = $region17
    $region16: #{tpu_custom_call.1} parent=1 // pred_region
      _
    $region17: #{tpu_custom_call.1} parent=1 // pred_fallthru
      _
    %71 = vsyncpa [#allocation3], 1

</llo_original>
